<compile_context>
chip_gen: v5e
topology: v5e:2x2
jax: 0.10.0
libtpu: 0.0.40
codegen_flags: <defaults>
</compile_context>

<pallas_src>
import jax
import jax.numpy as jnp
import numpy as np
from jax import lax
from jax.experimental import pallas as pl
from jax.experimental.pallas import tpu as pltpu

SAMPLE_RATE = 16000.0
N_FILTER_LAYERS = 5
COND_DIM = 64
LANES = 2 * COND_DIM  # 128: [frame t channels | frame t+T/2 channels]


# ---------------------------------------------------------------------------
# Kernel 1: frame-rate condition precompute
#   cond = tanh(x @ Wc + bc)                            (T, 64)
#   cpre = cond @ [W1c_0 | ... | W1c_4] + [b1_0..b1_4]  (T, 5*64)
# ---------------------------------------------------------------------------
def _cond_precompute_kernel(x_ref, wc_ref, bc_ref, w1cat_ref, b1cat_ref, o_ref):
    x = x_ref[...]                                                 # (T, I)
    cond = jnp.tanh(
        jnp.dot(x, wc_ref[...], preferred_element_type=jnp.float32) + bc_ref[...])
    o_ref[...] = (
        jnp.dot(cond, w1cat_ref[...], preferred_element_type=jnp.float32)
        + b1cat_ref[...])                                          # (T, 5*64)


def cond_precompute(x, w_cond, b_cond, w1cat, b1cat):
    B, T, I = x.shape
    C = N_FILTER_LAYERS * COND_DIM
    return pl.pallas_call(
        _cond_precompute_kernel,
        out_shape=jax.ShapeDtypeStruct((B, T, C), jnp.float32),
        grid_spec=pltpu.PrefetchScalarGridSpec(
            num_scalar_prefetch=0,
            grid=(B,),
            in_specs=[
                pl.BlockSpec((None, T, I), lambda b: (b, 0, 0)),
                pl.BlockSpec((I, COND_DIM), lambda b: (0, 0)),
                pl.BlockSpec((1, COND_DIM), lambda b: (0, 0)),
                pl.BlockSpec((COND_DIM, C), lambda b: (0, 0)),
                pl.BlockSpec((1, C), lambda b: (0, 0)),
            ],
            out_specs=pl.BlockSpec((None, T, C), lambda b: (b, 0, 0)),
        ),
        compiler_params=pltpu.CompilerParams(dimension_semantics=("parallel",)),
    )(x, w_cond, b_cond, w1cat, b1cat)


# ---------------------------------------------------------------------------
# Kernel 2: 5 stacked neural filter modules, lane-dense (two frames per vreg)
#   sa_ref/sb_ref : (FP, r, 1)      source samples of frame t / frame t+T2
#   cpre_ref      : (5, FP, 1, 128) per layer: [cond@W1c+b1 of frame t | of t+T2]
#   w1s_ref,w2_ref: (5, 1, 1, 128)  per-layer channel weights, tiled x2
#   b2_ref        : (5, 1, 1, 1)
#   oa_ref/ob_ref : (FP, r, 1)
# ---------------------------------------------------------------------------
def _nsf_filter_kernel(sa_ref, sb_ref, cpre_ref, w1s_ref, w2_ref, b2_ref,
                       oa_ref, ob_ref):
    lane = lax.broadcasted_iota(jnp.int32, (1, 1, LANES), 2)
    sel_a = lane < COND_DIM                                        # (1, 1, 128)

    sig_a = sa_ref[...]                                            # (FP, r, 1)
    sig_b = sb_ref[...]                                            # (FP, r, 1)
    for l in range(N_FILTER_LAYERS):
        c_l = cpre_ref[l]                                          # (FP, 1, 128) frame rate
        w1 = w1s_ref[l]                                            # (1, 1, 128)
        w2 = w2_ref[l]                                             # (1, 1, 128)
        b2 = b2_ref[l]                                             # (1, 1, 1)
        # nearest upsample of the condition happens via the sublane broadcast
        sig_sel = jnp.where(sel_a, sig_a, sig_b)                   # (FP, r, 128)
        h = jnp.tanh(c_l + sig_sel * w1)                           # (FP, r, 128) lane-dense
        prod = h * w2
        # W2 projection (64 -> 1) per frame-half as masked lane reductions
        pa = jnp.sum(jnp.where(sel_a, prod, 0.0), axis=-1, keepdims=True)
        pb = jnp.sum(jnp.where(sel_a, 0.0, prod), axis=-1, keepdims=True)
        sig_a = sig_a + pa + b2                                    # residual
        sig_b = sig_b + pb + b2
    oa_ref[...] = sig_a
    ob_ref[...] = sig_b


def _frames_per_block(T2, r, target_samples=2048, max_frames=256):
    """Frames per grid step: divides T2, ~target_samples samples/half, bounded VMEM."""
    target = min(max(1, target_samples // max(r, 1)), max_frames, T2)
    for f in range(target, 0, -1):
        if T2 % f == 0:
            return f
    return T2


def nsf_filter_stack(src_a, src_b, cpair, w1s, w2, b2):
    B, T2, r, _ = src_a.shape
    FP = _frames_per_block(T2, r)
    grid = (B, T2 // FP)
    half_sds = jax.ShapeDtypeStruct((B, T2, r, 1), jnp.float32)
    samp_spec = pl.BlockSpec((None, FP, r, 1), lambda b, t: (b, t, 0, 0))
    return pl.pallas_call(
        _nsf_filter_kernel,
        out_shape=(half_sds, half_sds),
        grid_spec=pltpu.PrefetchScalarGridSpec(
            num_scalar_prefetch=0,
            grid=grid,
            in_specs=[
                samp_spec,
                samp_spec,
                # cpair is (B*5, T2, 1, 128); block picks the 5 layer rows of batch b
                pl.BlockSpec((N_FILTER_LAYERS, FP, 1, LANES),
                             lambda b, t: (b, t, 0, 0)),
                pl.BlockSpec((N_FILTER_LAYERS, 1, 1, LANES),
                             lambda b, t: (0, 0, 0, 0)),
                pl.BlockSpec((N_FILTER_LAYERS, 1, 1, LANES),
                             lambda b, t: (0, 0, 0, 0)),
                pl.BlockSpec((N_FILTER_LAYERS, 1, 1, 1),
                             lambda b, t: (0, 0, 0, 0)),
            ],
            out_specs=[samp_spec, samp_spec],
        ),
        compiler_params=pltpu.CompilerParams(
            dimension_semantics=("parallel", "parallel")),
    )(src_a, src_b, cpair, w1s, w2, b2)


# ---------------------------------------------------------------------------
# Parameters (shared by kernel path and pure-JAX reference)
# ---------------------------------------------------------------------------
def init_params(input_size, key=0):
    keys = jax.random.split(jax.random.PRNGKey(key), 6)
    p = {}
    p["w_cond"] = 0.1 * jax.random.normal(keys[0], (input_size, COND_DIM), jnp.float32)
    p["b_cond"] = 0.1 * jax.random.normal(keys[1], (1, COND_DIM), jnp.float32)
    # Per-layer W1 is conceptually (1+64, 64) applied to concat([sig, cond]);
    # stored split as (signal row, condition rows).
    p["w1s"] = 0.1 * jax.random.normal(keys[2], (N_FILTER_LAYERS, 1, COND_DIM), jnp.float32)
    p["w1c"] = 0.1 * jax.random.normal(keys[3], (N_FILTER_LAYERS, COND_DIM, COND_DIM), jnp.float32)
    p["b1"] = jnp.zeros((N_FILTER_LAYERS, COND_DIM), jnp.float32)
    p["w2"] = 0.1 * jax.random.normal(keys[4], (N_FILTER_LAYERS, COND_DIM, 1), jnp.float32)
    p["b2"] = jnp.zeros((N_FILTER_LAYERS, 1), jnp.float32)
    return p


# ---------------------------------------------------------------------------
# Forward (glue in plain JAX is all frame-rate / O(L) 1-channel work)
# ---------------------------------------------------------------------------
def nsf_forward(x, params, waveform_length):
    B, T, _ = x.shape
    L = waveform_length
    # TODO(synk): general (non-integer) F.interpolate ratios need a gather path.
    assert L % T == 0 and L >= T, "waveform_length must be an integer multiple of the frame count"
    # TODO(synk): odd frame counts need a non-paired (64-lane) fallback kernel.
    assert T % 2 == 0, "frame count must be even for the lane-paired filter kernel"
    r = L // T
    T2 = T // 2

    # --- frame-rate condition precompute (Pallas kernel 1) ---
    w1cat = jnp.transpose(params["w1c"], (1, 0, 2)).reshape(
        COND_DIM, N_FILTER_LAYERS * COND_DIM)
    b1cat = params["b1"].reshape(1, N_FILTER_LAYERS * COND_DIM)
    cpre = cond_precompute(x, params["w_cond"], params["b_cond"], w1cat, b1cat)  # (B,T,320)
    # layer-major layout: (B, 5, T, 64); pair frame t with frame t+T2 on lanes
    cl = cpre.reshape(B, T, N_FILTER_LAYERS, COND_DIM).transpose(0, 2, 1, 3)
    cpair = jnp.concatenate([cl[:, :, :T2, :], cl[:, :, T2:, :]], axis=-1)
    cpair = cpair.reshape(B * N_FILTER_LAYERS, T2, 1, LANES)        # (B*5, T2, 1, 128)

    # --- SourceModule: nearest-upsample F0 (broadcast, no gather), integrate, sine ---
    # Computed dense in XLA (fuses with the cumsum); the kernel consumes the
    # finished source so no sparse-lane sin is evaluated on-chip.
    # TODO(synk): harmonic + noise branches of the full NSF source are omitted
    #             (y=None path, deterministic sine skeleton).
    F0 = x[:, :, 0]                                                   # (B, T)
    f0_up = jnp.broadcast_to(F0[:, :, None], (B, T, r)).reshape(B, L)
    phase = jnp.mod(jnp.cumsum(f0_up / SAMPLE_RATE, axis=1), 1.0)     # wrap for f32 robustness
    source = 0.1 * jnp.sin(2.0 * jnp.pi * phase)                      # (B, L)
    src4 = source.reshape(B, T, r, 1)
    src_a = src4[:, :T2]                                              # frames [0, T2)
    src_b = src4[:, T2:]                                              # frames [T2, T)

    # small weight re-layouts, tiled x2 for the 128-lane frame pairing (O(5*128))
    w1s_k = jnp.tile(params["w1s"].reshape(N_FILTER_LAYERS, 1, 1, COND_DIM), (1, 1, 1, 2))
    w2_k = jnp.tile(params["w2"][:, :, 0].reshape(N_FILTER_LAYERS, 1, 1, COND_DIM), (1, 1, 1, 2))
    b2_k = params["b2"].reshape(N_FILTER_LAYERS, 1, 1, 1)

    out_a, out_b = nsf_filter_stack(src_a, src_b, cpair, w1s_k, w2_k, b2_k)
    out = jnp.concatenate([out_a, out_b], axis=1)                     # (B, T, r, 1)
    return out.reshape(B, L, 1)


# ---------------------------------------------------------------------------
# Pure-JAX reference for correctness checking (original per-sample structure)
# ---------------------------------------------------------------------------
def nsf_forward_ref(x, params, waveform_length):
    B, T, _ = x.shape
    L = waveform_length
    r = L // T
    F0 = x[:, :, 0]
    cond = jnp.tanh(jnp.einsum("bti,io->bto", x, params["w_cond"])
                    + params["b_cond"][None, :, :])
    cond_up = jnp.broadcast_to(cond[:, :, None, :], (B, T, r, COND_DIM)).reshape(B, L, COND_DIM)
    f0_up = jnp.broadcast_to(F0[:, :, None], (B, T, r)).reshape(B, L)
    phase = jnp.mod(jnp.cumsum(f0_up / SAMPLE_RATE, axis=1), 1.0)[:, :, None]
    sig = 0.1 * jnp.sin(2.0 * jnp.pi * phase)
    for l in range(N_FILTER_LAYERS):
        h = jnp.einsum("btk,ko->bto", cond_up, params["w1c"][l])
        h = h + sig * params["w1s"][l][None, :, :]
        h = jnp.tanh(h + params["b1"][l][None, None, :])
        out = jnp.einsum("bto,oc->btc", h, params["w2"][l])
        sig = sig + out + params["b2"][l][None, None, :]
    return sig


if __name__ == "__main__":
    B, T, INPUT_SIZE = 2, 8, 4
    WAVEFORM_LENGTH = 256

    key = jax.random.PRNGKey(0)
    kx, kf = jax.random.split(key)
    x = jax.random.normal(kx, (B, T, INPUT_SIZE), jnp.float32)
    # make column 0 look like an F0 track (positive, ~100-300 Hz)
    f0 = 100.0 + 200.0 * jax.random.uniform(kf, (B, T), jnp.float32)
    x = x.at[:, :, 0].set(f0)

    params = init_params(INPUT_SIZE, key=0)

    out = nsf_forward(x, params, WAVEFORM_LENGTH)
    out = jax.block_until_ready(out)

    ref = nsf_forward_ref(x, params, WAVEFORM_LENGTH)
    np.testing.assert_allclose(np.asarray(out), np.asarray(ref), rtol=1e-4, atol=1e-5)
    assert out.shape == (B, WAVEFORM_LENGTH, 1)

    print("KERNEL_OK")
</pallas_src>

<mosaic_0001>
module attributes {stable_mosaic.version = 11 : i64} {
  func.func @_cond_precompute_kernel(%arg0: i32, %arg1: memref<1x8x4xf32, #tpu.memory_space<vmem>>, %arg2: memref<4x64xf32, #tpu.memory_space<vmem>>, %arg3: memref<1x64xf32, #tpu.memory_space<vmem>>, %arg4: memref<64x320xf32, #tpu.memory_space<vmem>>, %arg5: memref<1x320xf32, #tpu.memory_space<vmem>>, %arg6: memref<1x8x320xf32, #tpu.memory_space<vmem>>) attributes {dimension_semantics = [#tpu.dimension_semantics<parallel>], iteration_bounds = array<i64: 2>, scalar_prefetch = 0 : i64, scratch_operands = 0 : i64, tpu.core_type = #tpu.core_type<tc>, window_params = [{transform_indices = @transform_0, window_bounds = array<i64: 1, 8, 4>}, {pipeline_mode = #tpu.pipeline_mode<synchronous>, transform_indices = @transform_1, window_bounds = array<i64: 4, 64>}, {pipeline_mode = #tpu.pipeline_mode<synchronous>, transform_indices = @transform_2, window_bounds = array<i64: 1, 64>}, {pipeline_mode = #tpu.pipeline_mode<synchronous>, transform_indices = @transform_3, window_bounds = array<i64: 64, 320>}, {pipeline_mode = #tpu.pipeline_mode<synchronous>, transform_indices = @transform_4, window_bounds = array<i64: 1, 320>}, {transform_indices = @transform_5, window_bounds = array<i64: 1, 8, 320>}]} {
    %c0 = arith.constant 0 : index
    %c0_0 = arith.constant 0 : index
    %c0_1 = arith.constant 0 : index
    %0 = vector.load %arg1[%c0, %c0_0, %c0_1] : memref<1x8x4xf32, #tpu.memory_space<vmem>>, vector<1x8x4xf32>
    %1 = vector.shape_cast %0 : vector<1x8x4xf32> to vector<8x4xf32>
    %c0_2 = arith.constant 0 : index
    %c0_3 = arith.constant 0 : index
    %2 = vector.load %arg2[%c0_2, %c0_3] : memref<4x64xf32, #tpu.memory_space<vmem>>, vector<4x64xf32>
    %cst = arith.constant dense<0.000000e+00> : vector<8x64xf32>
    %3 = tpu.matmul %1, %2, %cst {dimension_numbers = #tpu.dot_dimension_numbers<[1], [0], [0], [1], [0, 0, 1, 1], [], []>} : vector<8x4xf32>, vector<4x64xf32>, vector<8x64xf32> -> vector<8x64xf32>
    %c0_4 = arith.constant 0 : index
    %c0_5 = arith.constant 0 : index
    %4 = vector.load %arg3[%c0_4, %c0_5] : memref<1x64xf32, #tpu.memory_space<vmem>>, vector<1x64xf32>
    %5 = vector.broadcast %4 : vector<1x64xf32> to vector<8x64xf32>
    %6 = arith.addf %3, %5 : vector<8x64xf32>
    %7 = math.tanh %6 : vector<8x64xf32>
    %c0_6 = arith.constant 0 : index
    %c0_7 = arith.constant 0 : index
    %8 = vector.load %arg4[%c0_6, %c0_7] : memref<64x320xf32, #tpu.memory_space<vmem>>, vector<64x320xf32>
    %cst_8 = arith.constant dense<0.000000e+00> : vector<8x320xf32>
    %9 = tpu.matmul %7, %8, %cst_8 {dimension_numbers = #tpu.dot_dimension_numbers<[1], [0], [0], [1], [0, 0, 1, 1], [], []>} : vector<8x64xf32>, vector<64x320xf32>, vector<8x320xf32> -> vector<8x320xf32>
    %c0_9 = arith.constant 0 : index
    %c0_10 = arith.constant 0 : index
    %10 = vector.load %arg5[%c0_9, %c0_10] : memref<1x320xf32, #tpu.memory_space<vmem>>, vector<1x320xf32>
    %11 = vector.broadcast %10 : vector<1x320xf32> to vector<8x320xf32>
    %12 = arith.addf %9, %11 : vector<8x320xf32>
    %c0_11 = arith.constant 0 : index
    %c0_12 = arith.constant 0 : index
    %c0_13 = arith.constant 0 : index
    %13 = vector.load %arg6[%c0_11, %c0_12, %c0_13] : memref<1x8x320xf32, #tpu.memory_space<vmem>>, vector<1x8x320xf32>
    %14 = vector.shape_cast %13 : vector<1x8x320xf32> to vector<8x320xf32>
    %15 = vector.shape_cast %12 : vector<8x320xf32> to vector<1x8x320xf32>
    tpu.vector_store %arg6[%c0_11, %c0_12, %c0_13], %15 {strides = array<i32>} : memref<1x8x320xf32, #tpu.memory_space<vmem>>, vector<1x8x320xf32>,
    return
  }
  func.func @transform_0(%arg0: i32) -> (i32, i32, i32) {
    %c0_i32 = arith.constant 0 : i32
    %c0_i32_0 = arith.constant 0 : i32
    %c0_i32_1 = arith.constant 0 : i32
    return %arg0, %c0_i32, %c0_i32_0 : i32, i32, i32
  }
  func.func @transform_1(%arg0: i32) -> (i32, i32) {
    %c0_i32 = arith.constant 0 : i32
    %c0_i32_0 = arith.constant 0 : i32
    %c0_i32_1 = arith.constant 0 : i32
    return %c0_i32, %c0_i32_0 : i32, i32
  }
  func.func @transform_2(%arg0: i32) -> (i32, i32) {
    %c0_i32 = arith.constant 0 : i32
    %c0_i32_0 = arith.constant 0 : i32
    %c0_i32_1 = arith.constant 0 : i32
    return %c0_i32, %c0_i32_0 : i32, i32
  }
  func.func @transform_3(%arg0: i32) -> (i32, i32) {
    %c0_i32 = arith.constant 0 : i32
    %c0_i32_0 = arith.constant 0 : i32
    %c0_i32_1 = arith.constant 0 : i32
    return %c0_i32, %c0_i32_0 : i32, i32
  }
  func.func @transform_4(%arg0: i32) -> (i32, i32) {
    %c0_i32 = arith.constant 0 : i32
    %c0_i32_0 = arith.constant 0 : i32
    %c0_i32_1 = arith.constant 0 : i32
    return %c0_i32, %c0_i32_0 : i32, i32
  }
  func.func @transform_5(%arg0: i32) -> (i32, i32, i32) {
    %c0_i32 = arith.constant 0 : i32
    %c0_i32_0 = arith.constant 0 : i32
    %c0_i32_1 = arith.constant 0 : i32
    return %arg0, %c0_i32, %c0_i32_0 : i32, i32, i32
  }
}

</mosaic_0001>

<llo_original>
// kernel: tpu_custom_call.1
$region0: #{tpu_custom_call.1}
  #allocation0 [shape = 'u32[]', space=smem, size = 0x4, offset = 0x4, fixed_abs, tag = 'smem constant byte address 0x4 - core index']
  #allocation1 [shape = 'u32[72,128]{1,0:T(1,128)}', space=vmem, size = 0x9000, scoped, tag = 'internal scratch']
  %s0 = inlined_call_operand.vmem [shape: f32[2,8,4], index: 0, kind: input, shape index: {}]
  %s1 = inlined_call_operand.vmem [shape: f32[4,64], index: 1, kind: input, shape index: {}]
  %s2 = inlined_call_operand.vmem [shape: f32[1,64], index: 2, kind: input, shape index: {}]
  %s3 = inlined_call_operand.hbm [shape: f32[64,320], index: 3, kind: input, shape index: {}]
  %s4 = inlined_call_operand.vmem [shape: f32[1,320], index: 4, kind: input, shape index: {}]
  %s5 = inlined_call_operand.hbm [shape: f32[2,8,320], index: 5, kind: output, shape index: {}]
  %s6 = sld [smem:[#allocation0]]
  $region57: #{tpu_custom_call.1} parent=0
    _
  %s8 = ssub.s32 1, %s6
  %s9 = scalar_select 0, %s8, %s6
  $region1: #{tpu_custom_call.1} parent=0
    #allocation2 [shape = 'u8[98304]{0}', space=vmem, size = 0x18000, scoped, tag = 'input window, operand 3, single buffered']
    #allocation3 [shape = 's32[2]{0}', space=sflag, size = 0x8, scoped, tag = 'scoped memory for tpu_custom_call.1']
    #allocation4 [shape = 's32[2]{0}', space=sflag, size = 0x8, scoped, tag = 'scoped memory for tpu_custom_call.1']
    #allocation5 [shape = 'u8[24576]{0}', space=vmem, size = 0x6000, scoped, tag = 'output window, operand 0']
    %10 = vsyncpa [#allocation3], 0
    %11 = vsyncpa [#allocation4], 0
    %s12 = scalar_lea.sflag [#allocation4], 1
    %13 = vsyncpa %s12, 0
    loop: start=0, step=1, limit=4
    $region2: #{tpu_custom_call.1} parent=1 // loop_pre_header
      _
    $region3: #{tpu_custom_call.1} parent=1 // loop_header
      %s15 = sphi 0, %s19
      %p16 = scmp.ge.s32.totalorder %s15, 4
      %s25 = sphi 0, %s27
      %s28 = sphi 0, %s25
      %s29 = sphi 0, %s28
      %s45 = sphi 0, %s29
      %s49 = sphi 0, %s49
      %s51 = sphi 0, %s49
      %s52 = sphi 0, %s51
      %s66 = sphi 0, %s52
      %s70 = sphi 0, %s70
      %s72 = sphi 0, %s70
      %s73 = sphi 0, %s72
      %s87 = sphi 0, %s73
      %s91 = sphi 0, %s91
      %s93 = sphi 0, %s91
      %s94 = sphi 0, %s93
      %s108 = sphi 0, %s94
      %s112 = sphi 0, %s112
      %s114 = sphi 0, %s112
      %s115 = sphi 0, %s114
      %s129 = sphi 0, %s115
      %s135 = sphi 0, %s137
      %s138 = sphi 0, %s135
      %s139 = sphi 0, %s138
      %s155 = sphi 0, %s139
    $region4: #{tpu_custom_call.1} parent=1 // loop_header_branch
      %18 = sbr.rel (%p16) target = $region8
    $region5: #{tpu_custom_call.1} parent=1 // loop_body
      %s20 = ssub.s32 %s15, 1
      %s21 = ssub.s32 %s15, 2
      %s22 = sadd.s32 %s15, 1
      %s23 = ssub.s32 %s15, %s22
      %p24 = scmp.eq.s32.totalorder %s23, 0
      %s26 = sadd.s32 %s25, 1
      %s27 = scalar_select %p24, %s25, %s26
      %p30 = pneg %p24
      %p31 = scmp.eq.s32.totalorder %s15, 1
      %p32 = por %p30, %p31
      %p33 = scmp.ne.s32.totalorder %s25, %s28
      %p34 = scmp.eq.s32.totalorder %s15, 0
      %p35 = por %p33, %p34
      %p36 = scmp.ne.s32.totalorder %s25, %s28
      %p37 = scmp.eq.s32.totalorder %s20, 1
      %p38 = por %p36, %p37
      %p39 = scmp.ne.s32.totalorder %s28, %s29
      %p40 = scmp.eq.s32.totalorder %s20, 0
      %p41 = por %p39, %p40
      %p42 = scmp.ne.s32.totalorder %s28, %s29
      %p43 = scmp.eq.s32.totalorder %s21, 1
      %p44 = por %p42, %p43
      %p46 = scmp.ne.s32.totalorder %s29, %s45
      %p47 = scmp.eq.s32.totalorder %s21, 0
      %p48 = por %p46, %p47
      %s50 = sadd.s32 %s49, 1
      %p53 = scmp.eq.s32.totalorder %s15, 1
      %p54 = scmp.ne.s32.totalorder %s49, %s51
      %p55 = scmp.eq.s32.totalorder %s15, 0
      %p56 = por %p54, %p55
      %p57 = scmp.ne.s32.totalorder %s49, %s51
      %p58 = scmp.eq.s32.totalorder %s20, 1
      %p59 = por %p57, %p58
      %p60 = scmp.ne.s32.totalorder %s51, %s52
      %p61 = scmp.eq.s32.totalorder %s20, 0
      %p62 = por %p60, %p61
      %p63 = scmp.ne.s32.totalorder %s51, %s52
      %p64 = scmp.eq.s32.totalorder %s21, 1
      %p65 = por %p63, %p64
      %p67 = scmp.ne.s32.totalorder %s52, %s66
      %p68 = scmp.eq.s32.totalorder %s21, 0
      %p69 = por %p67, %p68
      %s71 = sadd.s32 %s70, 1
      %p74 = scmp.eq.s32.totalorder %s15, 1
      %p75 = scmp.ne.s32.totalorder %s70, %s72
      %p76 = scmp.eq.s32.totalorder %s15, 0
      %p77 = por %p75, %p76
      %p78 = scmp.ne.s32.totalorder %s70, %s72
      %p79 = scmp.eq.s32.totalorder %s20, 1
      %p80 = por %p78, %p79
      %p81 = scmp.ne.s32.totalorder %s72, %s73
      %p82 = scmp.eq.s32.totalorder %s20, 0
      %p83 = por %p81, %p82
      %p84 = scmp.ne.s32.totalorder %s72, %s73
      %p85 = scmp.eq.s32.totalorder %s21, 1
      %p86 = por %p84, %p85
      %p88 = scmp.ne.s32.totalorder %s73, %s87
      %p89 = scmp.eq.s32.totalorder %s21, 0
      %p90 = por %p88, %p89
      %s92 = sadd.s32 %s91, 1
      %p95 = scmp.eq.s32.totalorder %s15, 1
      %p96 = scmp.ne.s32.totalorder %s91, %s93
      %p97 = scmp.eq.s32.totalorder %s15, 0
      %p98 = por %p96, %p97
      %p99 = scmp.ne.s32.totalorder %s91, %s93
      %p100 = scmp.eq.s32.totalorder %s20, 1
      %p101 = por %p99, %p100
      %p102 = scmp.ne.s32.totalorder %s93, %s94
      %p103 = scmp.eq.s32.totalorder %s20, 0
      %p104 = por %p102, %p103
      %p105 = scmp.ne.s32.totalorder %s93, %s94
      %p106 = scmp.eq.s32.totalorder %s21, 1
      %p107 = por %p105, %p106
      %p109 = scmp.ne.s32.totalorder %s94, %s108
      %p110 = scmp.eq.s32.totalorder %s21, 0
      %p111 = por %p109, %p110
      %s113 = sadd.s32 %s112, 1
      %p116 = scmp.eq.s32.totalorder %s15, 1
      %p117 = scmp.ne.s32.totalorder %s112, %s114
      %p118 = scmp.eq.s32.totalorder %s15, 0
      %p119 = por %p117, %p118
      %p120 = scmp.ne.s32.totalorder %s112, %s114
      %p121 = scmp.eq.s32.totalorder %s20, 1
      %p122 = por %p120, %p121
      %p123 = scmp.ne.s32.totalorder %s114, %s115
      %p124 = scmp.eq.s32.totalorder %s20, 0
      %p125 = por %p123, %p124
      %p126 = scmp.ne.s32.totalorder %s114, %s115
      %p127 = scmp.eq.s32.totalorder %s21, 1
      %p128 = por %p126, %p127
      %p130 = scmp.ne.s32.totalorder %s115, %s129
      %p131 = scmp.eq.s32.totalorder %s21, 0
      %p132 = por %p130, %p131
      %s133 = ssub.s32 %s15, %s22
      %p134 = scmp.eq.s32.totalorder %s133, 0
      %s136 = sadd.s32 %s135, 1
      %s137 = scalar_select %p134, %s135, %s136
      %p140 = pneg %p134
      %p141 = scmp.eq.s32.totalorder %s15, 1
      %p142 = por %p140, %p141
      %p143 = scmp.ne.s32.totalorder %s135, %s138
      %p144 = scmp.eq.s32.totalorder %s15, 0
      %p145 = por %p143, %p144
      %p146 = scmp.ne.s32.totalorder %s135, %s138
      %p147 = scmp.eq.s32.totalorder %s20, 1
      %p148 = por %p146, %p147
      %p149 = scmp.ne.s32.totalorder %s138, %s139
      %p150 = scmp.eq.s32.totalorder %s20, 0
      %p151 = por %p149, %p150
      %p152 = scmp.ne.s32.totalorder %s138, %s139
      %p153 = scmp.eq.s32.totalorder %s21, 1
      %p154 = por %p152, %p153
      %p156 = scmp.ne.s32.totalorder %s139, %s155
      %p157 = scmp.eq.s32.totalorder %s21, 0
      %p158 = por %p156, %p157
      %p159 = scmp.le.s32.totalorder 1, %s15
      %p160 = scmp.lt.s32.totalorder %s15, 3
      %p161 = pnand %p159, %p160
      %p162 = pneg %p161
      // Predicated region
      $region9: #{tpu_custom_call.1} parent=5 // pred_check
        _
      $region10: #{tpu_custom_call.1} parent=5 // pred_check_branch
        %164 = sbr.rel (%p161) target = $region12
      $region11: #{tpu_custom_call.1} parent=5 // pred_region
        %s165 = ssub.s32 %s15, 1
        // Predicated region
        $region13: #{tpu_custom_call.1} parent=11 // pred_check
          %p166 = pneg %p62
        $region14: #{tpu_custom_call.1} parent=11 // pred_check_branch
          %168 = sbr.rel (%p166) target = $region16
        $region15: #{tpu_custom_call.1} parent=11 // pred_region
          _
        $region16: #{tpu_custom_call.1} parent=11 // pred_fallthru
          _
        // Predicated region
        $region17: #{tpu_custom_call.1} parent=11 // pred_check
          %p169 = pneg %p83
        $region18: #{tpu_custom_call.1} parent=11 // pred_check_branch
          %171 = sbr.rel (%p169) target = $region20
        $region19: #{tpu_custom_call.1} parent=11 // pred_region
          _
        $region20: #{tpu_custom_call.1} parent=11 // pred_fallthru
          _
        // Predicated region
        $region21: #{tpu_custom_call.1} parent=11 // pred_check
          %p172 = pneg %p104
        $region22: #{tpu_custom_call.1} parent=11 // pred_check_branch
          %174 = sbr.rel (%p172) target = $region24
        $region23: #{tpu_custom_call.1} parent=11 // pred_region
          %176 = vsyncadd [#allocation3], 0
          %s177 = sshll.u32 %s3, 4
          %s178 = int_to_ptr.hbm [resolvable:$true] %s177
          %s179 = sshll.u32 [#allocation2], 4
          %s180 = int_to_ptr.vmem [resolvable:$true] %s179
          %185 = dma.hbm_to_vmem [thread:$0]  %s178, 3072, %s180, [#allocation3], 384, 384, 24
        $region24: #{tpu_custom_call.1} parent=11 // pred_fallthru
          _
        // Predicated region
        $region25: #{tpu_custom_call.1} parent=11 // pred_check
          %p186 = pneg %p125
        $region26: #{tpu_custom_call.1} parent=11 // pred_check_branch
          %188 = sbr.rel (%p186) target = $region28
        $region27: #{tpu_custom_call.1} parent=11 // pred_region
          _
        $region28: #{tpu_custom_call.1} parent=11 // pred_fallthru
          _
      $region12: #{tpu_custom_call.1} parent=5 // pred_fallthru
        _
      %p189 = scmp.lt.s32.totalorder %s15, 2
      // Predicated region
      $region29: #{tpu_custom_call.1} parent=5 // pred_check
        %p190 = pneg %p189
      $region30: #{tpu_custom_call.1} parent=5 // pred_check_branch
        %192 = sbr.rel (%p190) target = $region32
      $region31: #{tpu_custom_call.1} parent=5 // pred_region
        // Predicated region
        $region33: #{tpu_custom_call.1} parent=31 // pred_check
          %p193 = pneg %p35
        $region34: #{tpu_custom_call.1} parent=31 // pred_check_branch
          %195 = sbr.rel (%p193) target = $region36
        $region35: #{tpu_custom_call.1} parent=31 // pred_region
          %p196 = scmp.lt.s32.totalorder %s15, 1
          %s197 = scalar_select %p196, %s15, 1
          %s198 = smul.addr %s197, 8
          %s199 = scalar_lea.vmem %s0, %s198
        $region36: #{tpu_custom_call.1} parent=31 // pred_fallthru
          _
      $region32: #{tpu_custom_call.1} parent=5 // pred_fallthru
        _
      %p200 = scmp.le.s32.totalorder 1, %s15
      %p201 = scmp.lt.s32.totalorder %s15, 3
      %p202 = pnand %p200, %p201
      %p203 = pneg %p202
      // Predicated region
      $region37: #{tpu_custom_call.1} parent=5 // pred_check
        _
      $region38: #{tpu_custom_call.1} parent=5 // pred_check_branch
        %205 = sbr.rel (%p202) target = $region40
      $region39: #{tpu_custom_call.1} parent=5 // pred_region
        %s206 = ssub.s32 %s15, 1
        // Predicated region
        $region41: #{tpu_custom_call.1} parent=39 // pred_check
          %p207 = pneg %p104
        $region42: #{tpu_custom_call.1} parent=39 // pred_check_branch
          %209 = sbr.rel (%p207) target = $region44
        $region43: #{tpu_custom_call.1} parent=39 // pred_region
          %211 = dma.done [#allocation3], 3072
        $region44: #{tpu_custom_call.1} parent=39 // pred_fallthru
          _
        %p212 = scmp.lt.s32.totalorder %s20, 1
        %s213 = scalar_select %p212, %s20, 1
        %s214 = smul.addr %s213, 8
        %s215 = scalar_lea.vmem %s0, %s214
        %p216 = pneg %p41
        %p217 = pneg %p38
        %p218 = pneg %p62
        %p219 = pneg %p59
        %p220 = pneg %p83
        %p221 = pneg %p80
        %p222 = pneg %p104
        %p223 = pneg %p101
        %p224 = pneg %p125
        %p225 = pneg %p122
        %p226 = pneg %p151
        %p227 = pneg %p148
        %s228 = sand.u32 %s138, 1
        %s229 = scalar_lea.sflag [#allocation4], %s228
        %s230 = sand.u32 %s138, 1
        %s231 = smul.addr %s230, 24
        %s232 = scalar_lea.vmem [#allocation5], %s231
        %p233 = scmp.lt.s32.totalorder %s20, 1
        %s234 = scalar_select %p233, %s20, 1
        %s235 = smul.addr %s234, 8
        %s236 = scalar_lea.vmem %s0, %s235
        %v237 = vld [vmem:[%s236] sm:$0xff]
        %v238 = vld [vmem:[%s1] sm:$0xf]
        %v239 = vld [vmem:[%s2] sm:$0x1]
        %v241 = vperm.slane %v239, 0
        %vm243 = vcmask 31744
        %v245 = vsel %vm243, %v237, 0
        %vm247 = vcmask 1043456
        %v249 = vsel %vm247, %v238, 0
        %251 = vmatpush.msra.mxu0 0.0
        %252 = vmatpush.msra.mxu0 0.0
        %253 = vmatpush.msra.mxu0 0.0
        %254 = vmatpush.msra.mxu0 0.0
        %255 = vmatpush.msra.mxu0 0.0
        %256 = vmatpush.msra.mxu0 0.0
        %257 = vmatpush.msra.mxu0 0.0
        %258 = vmatpush.msra.mxu0 0.0
        %259 = vmatpush.msra.mxu0 0.0
        %260 = vmatpush.msra.mxu0 0.0
        %261 = vmatpush.msra.mxu0 0.0
        %262 = vmatpush.msra.mxu0 0.0
        %263 = vmatpush.msra.mxu0 0.0
        %264 = vmatpush.msra.mxu0 0.0
        %265 = vmatpush.msra.mxu0 0.0
        %266 = vmatpush.msra.mxu0 %v249
        %267 = vmatmul.f32.gmra.mxu0 %v245
        %v268 = vpop.f32.mrf.mxu0
        %v269 = vadd.f32 %v241, %v268
        %270 = vdwg.mxu0
        %v271 = vtanh.pop %v269
        %v272 = vld [vmem:[#allocation2] sm:$0xff]
        %v273 = vld [vmem:[#allocation2 + $0x8] sm:$0xff]
        %v274 = vld [vmem:[#allocation2 + $0x10] sm:$0xff]
        %v275 = vld [vmem:[#allocation2 + $0x18] sm:$0xff]
        %v276 = vld [vmem:[#allocation2 + $0x20] sm:$0xff]
        %v277 = vld [vmem:[#allocation2 + $0x28] sm:$0xff]
        %v278 = vld [vmem:[#allocation2 + $0x30] sm:$0xff]
        %v279 = vld [vmem:[#allocation2 + $0x38] sm:$0xff]
        %v280 = vld [vmem:[#allocation2 + $0x40] sm:$0xff]
        %v281 = vld [vmem:[#allocation2 + $0x48] sm:$0xff]
        %v282 = vld [vmem:[#allocation2 + $0x50] sm:$0xff]
        %v283 = vld [vmem:[#allocation2 + $0x58] sm:$0xff]
        %v284 = vld [vmem:[#allocation2 + $0x60] sm:$0xff]
        %v285 = vld [vmem:[#allocation2 + $0x68] sm:$0xff]
        %v286 = vld [vmem:[#allocation2 + $0x70] sm:$0xff]
        %v287 = vld [vmem:[#allocation2 + $0x78] sm:$0xff]
        %v288 = vld [vmem:[#allocation2 + $0x80] sm:$0xff]
        %v289 = vld [vmem:[#allocation2 + $0x88] sm:$0xff]
        %v290 = vld [vmem:[#allocation2 + $0x90] sm:$0xff]
        %v291 = vld [vmem:[#allocation2 + $0x98] sm:$0xff]
        %v292 = vld [vmem:[#allocation2 + $0xa0] sm:$0xff]
        %v293 = vld [vmem:[#allocation2 + $0xa8] sm:$0xff]
        %v294 = vld [vmem:[#allocation2 + $0xb0] sm:$0xff]
        %v295 = vld [vmem:[#allocation2 + $0xb8] sm:$0xff]
        %v296 = vld [vmem:[%s4] sm:$0x7]
        %v298 = vperm.slane %v296, 0
        %v299 = vperm.slane %v296, 1
        %v300 = vperm.slane %v296, 2
        %vm304 = vcmask 523264
        %v306 = vsel %vm304, %v271, 0
        %308 = vmatpush.msra.mxu0 0.0
        %309 = vmatpush.msra.mxu0 0.0
        %310 = vmatpush.msra.mxu0 0.0
        %311 = vmatpush.msra.mxu0 0.0
        %312 = vmatpush.msra.mxu0 0.0
        %313 = vmatpush.msra.mxu0 0.0
        %314 = vmatpush.msra.mxu0 0.0
        %315 = vmatpush.msra.mxu0 0.0
        %316 = vmatpush.msra.mxu0 %v293
        %317 = vmatpush.msra.mxu0 %v290
        %318 = vmatpush.msra.mxu0 %v287
        %319 = vmatpush.msra.mxu0 %v284
        %320 = vmatpush.msra.mxu0 %v281
        %321 = vmatpush.msra.mxu0 %v278
        %322 = vmatpush.msra.mxu0 %v275
        %323 = vmatpush.msra.mxu0 %v272
        %324 = vmatmul.f32.gmra.mxu0 %v306
        %v325 = vpop.f32.mrf.mxu0
        %v326 = vadd.f32 %v298, %v325
        %327 = vdwg.mxu0
        %328 = vmatpush.msra.mxu0 0.0
        %329 = vmatpush.msra.mxu0 0.0
        %330 = vmatpush.msra.mxu0 0.0
        %331 = vmatpush.msra.mxu0 0.0
        %332 = vmatpush.msra.mxu0 0.0
        %333 = vmatpush.msra.mxu0 0.0
        %334 = vmatpush.msra.mxu0 0.0
        %335 = vmatpush.msra.mxu0 0.0
        %336 = vmatpush.msra.mxu0 %v294
        %337 = vmatpush.msra.mxu0 %v291
        %338 = vmatpush.msra.mxu0 %v288
        %339 = vmatpush.msra.mxu0 %v285
        %340 = vmatpush.msra.mxu0 %v282
        %341 = vmatpush.msra.mxu0 %v279
        %342 = vmatpush.msra.mxu0 %v276
        %343 = vmatpush.msra.mxu0 %v273
        %344 = vmatmul.f32.gmra.mxu0 %v306
        %v345 = vpop.f32.mrf.mxu0
        %v346 = vadd.f32 %v299, %v345
        %347 = vdwg.mxu0
        %348 = vmatpush.msra.mxu0 0.0
        %349 = vmatpush.msra.mxu0 0.0
        %350 = vmatpush.msra.mxu0 0.0
        %351 = vmatpush.msra.mxu0 0.0
        %352 = vmatpush.msra.mxu0 0.0
        %353 = vmatpush.msra.mxu0 0.0
        %354 = vmatpush.msra.mxu0 0.0
        %355 = vmatpush.msra.mxu0 0.0
        %356 = vmatpush.msra.mxu0 %v295
        %357 = vmatpush.msra.mxu0 %v292
        %358 = vmatpush.msra.mxu0 %v289
        %359 = vmatpush.msra.mxu0 %v286
        %360 = vmatpush.msra.mxu0 %v283
        %361 = vmatpush.msra.mxu0 %v280
        %362 = vmatpush.msra.mxu0 %v277
        %363 = vmatpush.msra.mxu0 %v274
        %364 = vmatmul.f32.gmra.mxu0 %v306
        %v365 = vpop.f32.mrf.mxu0
        %v366 = vadd.f32 %v300, %v365
        %367 = vdwg.mxu0
        %368 = vst [vmem:[%s232] sm:$0xff] %v326
        %369 = vst [vmem:[%s232 + $0x8] sm:$0xff] %v346
        %370 = vst.msk [vmem:[%s232 + $0x10] sm:$0xff] %vm304, %v366
        %s371 = sand.u32 %s138, 1
        %s372 = scalar_lea.sflag [#allocation4], %s371
        %s373 = sand.u32 %s138, 1
        %s374 = smul.addr %s373, 24
        %s375 = scalar_lea.vmem [#allocation5], %s374
        // Predicated region
        $region45: #{tpu_custom_call.1} parent=39 // pred_check
          %p376 = pneg %p148
        $region46: #{tpu_custom_call.1} parent=39 // pred_check_branch
          %378 = sbr.rel (%p376) target = $region48
        $region47: #{tpu_custom_call.1} parent=39 // pred_region
          %380 = vsyncadd %s372, 0
          %s381 = smul.addr %s20, 3
          %s382 = smul.addr %s381, 8
          %s383 = scalar_lea.hbm %s5, %s382
          %s385 = sshll.u32 %s375, 4
          %s386 = int_to_ptr.vmem [resolvable:$true] %s385
          %s387 = sshll.u32 %s383, 4
          %s388 = int_to_ptr.hbm [resolvable:$true] %s387
          %390 = dma.vmem_to_hbm [thread:$0]  %s386, 384, %s388, %s372
        $region48: #{tpu_custom_call.1} parent=39 // pred_fallthru
          _
      $region40: #{tpu_custom_call.1} parent=5 // pred_fallthru
        _
      %p391 = scmp.le.s32.totalorder 2, %s15
      // Predicated region
      $region49: #{tpu_custom_call.1} parent=5 // pred_check
        %p392 = pneg %p391
      $region50: #{tpu_custom_call.1} parent=5 // pred_check_branch
        %394 = sbr.rel (%p392) target = $region52
      $region51: #{tpu_custom_call.1} parent=5 // pred_region
        %s395 = ssub.s32 %s15, 2
        // Predicated region
        $region53: #{tpu_custom_call.1} parent=51 // pred_check
          %p396 = pneg %p154
        $region54: #{tpu_custom_call.1} parent=51 // pred_check_branch
          %398 = sbr.rel (%p396) target = $region56
        $region55: #{tpu_custom_call.1} parent=51 // pred_region
          %s399 = sand.u32 %s139, 1
          %s400 = scalar_lea.sflag [#allocation4], %s399
          %s401 = sand.u32 %s139, 1
          %s402 = smul.addr %s401, 24
          %s403 = scalar_lea.vmem [#allocation5], %s402
          %405 = dma.done %s400, 384
        $region56: #{tpu_custom_call.1} parent=51 // pred_fallthru
          _
      $region52: #{tpu_custom_call.1} parent=5 // pred_fallthru
        _
    $region6: #{tpu_custom_call.1} parent=1 // loop_footer
      %s19 = sadd.s32 1, %s15
    $region7: #{tpu_custom_call.1} parent=1 // loop_footer_branch
      %14 = sbr.rel target = $region3
    $region8: #{tpu_custom_call.1} parent=1 // loop_exit
      _
    %406 = vsyncpa [#allocation3], 1
    %s407 = scalar_lea.sflag [#allocation3], 1
    %408 = vsyncpa %s407, 1
    %409 = vsyncpa [#allocation4], 1
    %s410 = scalar_lea.sflag [#allocation4], 1
    %411 = vsyncpa %s410, 1

</llo_original>
